<compile_context>
chip_gen: v6e
topology: v6e:2x2x1
jax: 0.10.0
libtpu: 0.0.40
codegen_flags: <defaults>
</compile_context>

<pallas_src>
import functools

import jax
import jax.numpy as jnp
from jax.experimental import pallas as pl
from jax.experimental.pallas import tpu as pltpu


def _round_up(n, m):
    return (n + m - 1) // m * m


def _gem_kernel(p_ref, x_ref, o_ref, *, eps, inv_hw, static_p):
    # p_ref: SMEM (1,)            -- learnable GeM exponent (unused if static_p)
    # x_ref: VMEM (TILE_BC, HW)   -- one tile of flattened activations
    # o_ref: VMEM (1, TILE_BC)    -- lane-dense pooled output for this tile
    x = x_ref[...].astype(jnp.float32)
    x = jnp.maximum(x, jnp.float32(eps))          # clamp(min=eps)

    if static_p is None:
        # Dynamic / learnable exponent: x ** p (EUP exp/log path).
        p = p_ref[0]
        xp = jnp.power(x, p)
        inv_p = 1.0 / p
    else:
        # Static integer exponent: multiply chain on the VPU, no EUP work
        # in the elementwise hot loop.
        xp = x
        for _ in range(int(static_p) - 1):
            xp = xp * x
        inv_p = jnp.float32(1.0 / float(static_p))

    # Lane-dense reduction over HW on the (otherwise idle) MXU:
    #   (1, HW) . (TILE_BC, HW)^T -> (1, TILE_BC)
    # avoids a lane-sparse (TILE_BC, 1) result and masked partial stores.
    ones_row = jnp.ones((1, xp.shape[-1]), jnp.float32)
    s = jax.lax.dot_general(
        ones_row, xp,
        dimension_numbers=(((1,), (1,)), ((), ())),
        preferred_element_type=jnp.float32,
    )
    m = s * jnp.float32(inv_hw)                   # mean over H*W (folded scale)
    out = jnp.power(m, inv_p)                     # ** (1/p), only TILE_BC elems
    o_ref[...] = out.astype(o_ref.dtype)


def gem_pallas(x, p, eps=1e-6, *, static_p=None):
    """GeM pooling. x: (B, C, H, W); p: shape-(1,) exponent. Returns (B, C).

    If `static_p` is an int (frozen exponent, e.g. inference with p=3), the
    elementwise power is specialized to a multiply chain.
    """
    B, C, H, W = x.shape
    BC, HW = B * C, H * W
    x2d = x.reshape(BC, HW)

    # --- tile-size selection (VMEM-safe on every TPU generation) ----------
    # Target ~8 MiB per input block; with double buffering that is ~16 MiB,
    # inside the scoped-VMEM defaults of v5e/v6e and v7x's 64 MiB physical.
    itemsize = jnp.dtype(x.dtype).itemsize
    sublane_mult = 8 * max(1, 4 // itemsize)      # f32 -> 8, bf16 -> 16
    target_block_bytes = 8 * 1024 * 1024
    tile = max(1, target_block_bytes // max(1, HW * itemsize))
    tile = min(tile, 4096)
    if tile >= BC:
        TILE_BC = _round_up(BC, sublane_mult)     # single grid step
    else:
        # Multiple of 128 keeps the (1, TILE_BC) output block lane-aligned.
        TILE_BC = max(128, (tile // 128) * 128)
    # TODO(synk): for very large H*W (>~50K) add a second "arbitrary" grid axis
    # over HW with a partial-sum accumulator instead of one full row per block.
    BC_pad = _round_up(BC, TILE_BC)
    num_tiles = BC_pad // TILE_BC

    if BC_pad != BC:
        # Pad rows with 1.0 so padded lanes stay finite; they are sliced away.
        pad = jnp.ones((BC_pad - BC, HW), x2d.dtype)
        x2d = jnp.concatenate([x2d, pad], axis=0)

    p_arr = jnp.asarray(p, jnp.float32).reshape(1)

    kernel = functools.partial(
        _gem_kernel, eps=float(eps), inv_hw=1.0 / float(HW), static_p=static_p)

    out2d = pl.pallas_call(
        kernel,
        out_shape=jax.ShapeDtypeStruct((1, BC_pad), x.dtype),
        grid=(num_tiles,),
        in_specs=[
            pl.BlockSpec(memory_space=pltpu.MemorySpace.SMEM),   # p scalar
            pl.BlockSpec((TILE_BC, HW), lambda i: (i, 0)),       # row tile
        ],
        out_specs=pl.BlockSpec((1, TILE_BC), lambda i: (0, i)),  # lane-dense
        compiler_params=pltpu.CompilerParams(
            dimension_semantics=("parallel",),    # rows independent: megacore
            vmem_limit_bytes=48 * 1024 * 1024,
        ),
    )(p_arr, x2d)

    return out2d[0, :BC].reshape(B, C)


if __name__ == "__main__":
    key = jax.random.PRNGKey(0)
    B, C, H, W = 2, 4, 16, 16
    x = jax.random.normal(key, (B, C, H, W), dtype=jnp.float32)

    # Deterministic parameter init, matching nn.Parameter(torch.ones(1) * 3)
    p = jnp.ones((1,), dtype=jnp.float32) * 3.0
    eps = 1e-6

    # Reference in plain JAX (same math as the PyTorch module).
    ref = jnp.power(
        jnp.mean(jnp.power(jnp.maximum(x, eps), p[0]), axis=(-2, -1)), 1.0 / p[0]
    )

    # Dynamic (learnable-p) path -- matches GeM.forward semantics.
    y = gem_pallas(x, p, eps)
    jax.block_until_ready(y)
    assert y.shape == (B, C)
    assert jnp.allclose(y, ref, rtol=1e-4, atol=1e-5)

    # Static-p fast path (p frozen at 3): multiply chain instead of exp/log.
    y_fast = gem_pallas(x, p, eps, static_p=3)
    jax.block_until_ready(y_fast)
    assert jnp.allclose(y_fast, ref, rtol=1e-4, atol=1e-5)

    print("KERNEL_OK")
</pallas_src>

<mosaic_0001>
module attributes {stable_mosaic.version = 11 : i64} {
  func.func @_gem_kernel(%arg0: i32, %arg1: memref<1xf32, #tpu.memory_space<smem>>, %arg2: memref<8x256xf32, #tpu.memory_space<vmem>>, %arg3: memref<1x8xf32, #tpu.memory_space<vmem>>) attributes {dimension_semantics = [#tpu.dimension_semantics<parallel>], iteration_bounds = array<i64: 1>, scalar_prefetch = 0 : i64, scratch_operands = 0 : i64, tpu.core_type = #tpu.core_type<tc>, window_params = [{transform_indices = @transform_0, window_bounds = array<i64: 1>}, {transform_indices = @transform_1, window_bounds = array<i64: 8, 256>}, {transform_indices = @transform_2, window_bounds = array<i64: 1, 8>}]} {
    %c0 = arith.constant 0 : index
    %c0_0 = arith.constant 0 : index
    %0 = vector.load %arg2[%c0, %c0_0] : memref<8x256xf32, #tpu.memory_space<vmem>>, vector<8x256xf32>
    %cst = arith.constant 9.99999997E-7 : f32
    %1 = vector.broadcast %cst : f32 to vector<8x256xf32>
    %2 = arith.maximumf %0, %1 : vector<8x256xf32>
    %c0_1 = arith.constant 0 : index
    %3 = memref.load %arg1[%c0_1] : memref<1xf32, #tpu.memory_space<smem>>
    %4 = vector.broadcast %3 : f32 to vector<8x256xf32>
    %5 = math.powf %2, %4 : vector<8x256xf32>
    %cst_2 = arith.constant 1.000000e+00 : f32
    %6 = arith.divf %cst_2, %3 : f32
    %cst_3 = arith.constant 1.000000e+00 : f32
    %7 = vector.broadcast %cst_3 : f32 to vector<1x256xf32>
    %cst_4 = arith.constant dense<0.000000e+00> : vector<1x8xf32>
    %8 = tpu.matmul %7, %5, %cst_4 {dimension_numbers = #tpu.dot_dimension_numbers<[1], [1], [0], [0], [0, 0, 1, 0], [], []>} : vector<1x256xf32>, vector<8x256xf32>, vector<1x8xf32> -> vector<1x8xf32>
    %cst_5 = arith.constant 3.906250e-03 : f32
    %9 = vector.broadcast %cst_5 : f32 to vector<1x8xf32>
    %10 = arith.mulf %8, %9 : vector<1x8xf32>
    %11 = vector.broadcast %6 : f32 to vector<1x8xf32>
    %12 = math.powf %10, %11 : vector<1x8xf32>
    %c0_6 = arith.constant 0 : index
    %c0_7 = arith.constant 0 : index
    %13 = vector.load %arg3[%c0_6, %c0_7] : memref<1x8xf32, #tpu.memory_space<vmem>>, vector<1x8xf32>
    tpu.vector_store %arg3[%c0_6, %c0_7], %12 {strides = array<i32>} : memref<1x8xf32, #tpu.memory_space<vmem>>, vector<1x8xf32>,
    return
  }
  func.func @transform_0(%arg0: i32) -> i32 {
    %c0_i32 = arith.constant 0 : i32
    %c0_i32_0 = arith.constant 0 : i32
    return %c0_i32 : i32
  }
  func.func @transform_1(%arg0: i32) -> (i32, i32) {
    %c0_i32 = arith.constant 0 : i32
    %c0_i32_0 = arith.constant 0 : i32
    return %arg0, %c0_i32 : i32, i32
  }
  func.func @transform_2(%arg0: i32) -> (i32, i32) {
    %c0_i32 = arith.constant 0 : i32
    %c0_i32_0 = arith.constant 0 : i32
    return %c0_i32, %arg0 : i32, i32
  }
}

</mosaic_0001>

<llo_original>
// kernel: tpu_custom_call.1
$region0: #{tpu_custom_call.1}
  #allocation0 [shape = 'u32[]', space=smem, size = 0x4, offset = 0x4, fixed_abs, tag = 'smem constant byte address 0x4 - core index']
  #allocation1 [shape = 'u32[144,128]{1,0:T(1,128)}', space=vmem, size = 0x12000, scoped, tag = 'internal scratch']
  #allocation2 [shape = 'f32[1]{0:T(128)S(6)}', space=smem, size = 0x200, scoped, tag = 'scoped memory for tpu_custom_call.1']
  %s0 = inlined_call_operand.<no memory space> [shape: f32[1], index: 0, kind: input, shape index: {}]
  %s1 = inlined_call_operand.hbm [shape: f32[8,256], index: 1, kind: input, shape index: {}]
  %s2 = inlined_call_operand.hbm [shape: f32[1,8], index: 2, kind: output, shape index: {}]
  %s3 = sld [smem:[#allocation0]]
  $region22: #{tpu_custom_call.1} parent=0
    _
  %s5 = ssub.s32 1, %s3
  %s6 = scalar_select 0, %s5, %s3
  %7 = sst [smem:[#allocation2]] %s0
  $region1: #{tpu_custom_call.1} parent=0
    #allocation3 [shape = 'u8[8192]{0}', space=vmem, size = 0x2000, scoped, tag = 'input window, operand 1, single buffered']
    #allocation4 [shape = 's32[1]{0}', space=sflag, size = 0x4, scoped, tag = 'scoped memory for tpu_custom_call.1']
    #allocation5 [shape = 's32[1]{0}', space=sflag, size = 0x4, scoped, tag = 'scoped memory for tpu_custom_call.1']
    #allocation6 [shape = 'u8[512]{0}', space=vmem, size = 0x400, scoped, tag = 'output window, operand 0, single buffered']
    %8 = vsyncpa [#allocation4], 0
    %9 = vsyncpa [#allocation5], 0
    // Predicated region
    $region2: #{tpu_custom_call.1} parent=1 // pred_check
      _
    $region3: #{tpu_custom_call.1} parent=1 // pred_check_branch
      %11 = sbr.rel (0) target = $region5
    $region4: #{tpu_custom_call.1} parent=1 // pred_region
      _
    $region5: #{tpu_custom_call.1} parent=1 // pred_fallthru
      _
    // Predicated region
    $region6: #{tpu_custom_call.1} parent=1 // pred_check
      _
    $region7: #{tpu_custom_call.1} parent=1 // pred_check_branch
      %13 = sbr.rel (0) target = $region9
    $region8: #{tpu_custom_call.1} parent=1 // pred_region
      %s15 = ssub.s32 256, 256
      %16 = vsyncadd [#allocation4], %s15
      %s18 = sshll.u32 [#allocation3], 4
      %s19 = int_to_ptr.vmem [resolvable:$true] %s18
      %21 = dma.hbm_to_vmem [thread:$0]  %s1, 256, %s19, [#allocation4]
    $region9: #{tpu_custom_call.1} parent=1 // pred_fallthru
      _
    // Predicated region
    $region10: #{tpu_custom_call.1} parent=1 // pred_check
      _
    $region11: #{tpu_custom_call.1} parent=1 // pred_check_branch
      %23 = sbr.rel (0) target = $region13
    $region12: #{tpu_custom_call.1} parent=1 // pred_region
      %24 = dma.done [#allocation4], 256
    $region13: #{tpu_custom_call.1} parent=1 // pred_fallthru
      _
    %v25 = vld [vmem:[#allocation3] sm:$0xff]
    %v26 = vld [vmem:[#allocation3 + $0x8] sm:$0xff]
    %v27 = vmax.f32 %v25, 1e-06
    %v28 = vmax.f32 %v26, 1e-06
    %s29 = sld [smem:[#allocation2]]
    %v30 = vstv %s29
    %v31 = vpow.f32 %v27, %v30
    %v32 = vpow.f32 %v28, %v30
    %v33 = vstv %s29
    %v34 = vrcp.pop %v33
    %s35 = vtos %v34
    %36 = vmatprep.subr.mxu0 0.0
    %37 = vmatpush1.xpose.msra.mxu0 0.0
    %38 = vmatprep.subr.mxu0 0.0
    %39 = vmatpush1.xpose.msra.mxu0 0.0
    %40 = vmatprep.subr.mxu0 0.0
    %41 = vmatpush1.xpose.msra.mxu0 0.0
    %42 = vmatprep.subr.mxu0 0.0
    %43 = vmatpush1.xpose.msra.mxu0 0.0
    %44 = vmatprep.subr.mxu0 0.0
    %45 = vmatpush1.xpose.msra.mxu0 0.0
    %46 = vmatprep.subr.mxu0 0.0
    %47 = vmatpush1.xpose.msra.mxu0 0.0
    %48 = vmatprep.subr.mxu0 0.0
    %49 = vmatpush1.xpose.msra.mxu0 0.0
    %50 = vmatprep.subr.mxu0 0.0
    %51 = vmatpush1.xpose.msra.mxu0 0.0
    %52 = vmatprep.subr.mxu0 0.0
    %53 = vmatpush1.xpose.msra.mxu0 0.0
    %54 = vmatprep.subr.mxu0 0.0
    %55 = vmatpush1.xpose.msra.mxu0 0.0
    %56 = vmatprep.subr.mxu0 0.0
    %57 = vmatpush1.xpose.msra.mxu0 0.0
    %58 = vmatprep.subr.mxu0 0.0
    %59 = vmatpush1.xpose.msra.mxu0 0.0
    %60 = vmatprep.subr.mxu0 0.0
    %61 = vmatpush1.xpose.msra.mxu0 0.0
    %62 = vmatprep.subr.mxu0 0.0
    %63 = vmatpush1.xpose.msra.mxu0 0.0
    %64 = vmatprep.subr.mxu0 0.0
    %65 = vmatpush1.xpose.msra.mxu0 0.0
    %66 = vmatprep.subr.mxu0 %v32
    %67 = vmatpush1.xpose.msra.mxu0 %v31
    %68 = vmatprep.subr.mxu0 0.0
    %69 = vmatpush2.xpose.msra.mxu0 0.0
    %70 = vmatprep.subr.mxu0 0.0
    %71 = vmatpush2.xpose.msra.mxu0 0.0
    %72 = vmatprep.subr.mxu0 0.0
    %73 = vmatpush2.xpose.msra.mxu0 0.0
    %74 = vmatprep.subr.mxu0 0.0
    %75 = vmatpush2.xpose.msra.mxu0 0.0
    %76 = vmatprep.subr.mxu0 0.0
    %77 = vmatpush2.xpose.msra.mxu0 0.0
    %78 = vmatprep.subr.mxu0 0.0
    %79 = vmatpush2.xpose.msra.mxu0 0.0
    %80 = vmatprep.subr.mxu0 0.0
    %81 = vmatpush2.xpose.msra.mxu0 0.0
    %82 = vmatprep.subr.mxu0 0.0
    %83 = vmatpush2.xpose.msra.mxu0 0.0
    %84 = vmatprep.subr.mxu0 0.0
    %85 = vmatpush2.xpose.msra.mxu0 0.0
    %86 = vmatprep.subr.mxu0 0.0
    %87 = vmatpush2.xpose.msra.mxu0 0.0
    %88 = vmatprep.subr.mxu0 0.0
    %89 = vmatpush2.xpose.msra.mxu0 0.0
    %90 = vmatprep.subr.mxu0 0.0
    %91 = vmatpush2.xpose.msra.mxu0 0.0
    %92 = vmatprep.subr.mxu0 0.0
    %93 = vmatpush2.xpose.msra.mxu0 0.0
    %94 = vmatprep.subr.mxu0 0.0
    %95 = vmatpush2.xpose.msra.mxu0 0.0
    %96 = vmatprep.subr.mxu0 0.0
    %97 = vmatpush2.xpose.msra.mxu0 0.0
    %98 = vmatprep.subr.mxu0 0.0
    %99 = vmatpush2.xpose.msra.mxu0 0.0
    %100 = vmatprep.mubr.f32.mxu0 1.0
    %101 = vmatmul.mubr.f32.gmra.mxu0 1.0
    %v102 = vpop.f32.mrf.mxu0
    %v103 = vadd.f32 0.0, %v102
    %v104 = vpop.f32.mrf.mxu0
    %105 = vdwg.mxu0
    %v106 = vmul.f32 %v103, 0.00390625
    %v107 = vstv %s35
    %v108 = vpow.f32 %v106, %v107
    %vm109 = vcmask 57344
    %110 = vst.msk [vmem:[#allocation6] sm:$0x1] %vm109, %v108
    // Predicated region
    $region14: #{tpu_custom_call.1} parent=1 // pred_check
      _
    $region15: #{tpu_custom_call.1} parent=1 // pred_check_branch
      %112 = sbr.rel (0) target = $region17
    $region16: #{tpu_custom_call.1} parent=1 // pred_region
      %s114 = ssub.s32 16, 16
      %115 = vsyncadd [#allocation5], %s114
      %s117 = sshll.u32 [#allocation6], 4
      %s118 = int_to_ptr.vmem [resolvable:$true] %s117
      %120 = dma.vmem_to_hbm [thread:$0]  %s118, 16, %s2, [#allocation5]
    $region17: #{tpu_custom_call.1} parent=1 // pred_fallthru
      _
    // Predicated region
    $region18: #{tpu_custom_call.1} parent=1 // pred_check
      _
    $region19: #{tpu_custom_call.1} parent=1 // pred_check_branch
      %122 = sbr.rel (0) target = $region21
    $region20: #{tpu_custom_call.1} parent=1 // pred_region
      %123 = dma.done [#allocation5], 16
    $region21: #{tpu_custom_call.1} parent=1 // pred_fallthru
      _
    %124 = vsyncpa [#allocation4], 1
    %125 = vsyncpa [#allocation5], 1

</llo_original>
